<compile_context>
chip_gen: v6e
topology: v6e:2x2x1
jax: 0.10.0
libtpu: 0.0.40
codegen_flags: <defaults>
</compile_context>

<pallas_src>
import functools

import jax
import jax.numpy as jnp
from jax.experimental import pallas as pl
from jax.experimental.pallas import tpu as pltpu

LANE_W = 512  # lane-dense last dim (multiple of 128)


def _tpu_defaults():
    """(max_row_tile, num_cores, vmem_limit_bytes) per TPU generation (conservative)."""
    kind = ""
    try:
        dev = jax.devices()[0]
        if dev.platform == "tpu":
            kind = (getattr(dev, "device_kind", "") or "").lower()
    except Exception:
        pass
    if "v6" in kind:                       # v6e: 1 TC, 128 MiB physical VMEM
        return 2048, 1, 64 * 1024 * 1024
    if "v7" in kind or "tpu7" in kind:     # v7x: 2 TCs, 64 MiB physical VMEM -> stay
        return 1024, 2, None               #   inside the 32 MiB scoped default
    return 1024, 1, 64 * 1024 * 1024       # v5e / older / unknown


def _sublane_multiple(dtype):
    return max(8, 32 // jnp.dtype(dtype).itemsize)   # 8 f32, 16 bf16, 32 int8/fp8


def _pick_row_tile(rows, max_rows, sub, parts):
    """Largest row tile <= max_rows that is a sublane multiple and never exceeds rows."""
    if rows <= sub:
        return rows                                    # full-dim escape (layout-legal)
    target = pl.cdiv(rows, parts)
    rt = min(max_rows, target, rows)
    return max(sub, (rt // sub) * sub)


def _qfocal_elementwise(p, t, gamma, alpha):
    """QFocal loss, elementwise, in f32.  One EUP exp; no true divide; no generic pow."""
    e = jnp.exp(-jnp.abs(p))                       # reused by BCE and sigmoid
    # Numerically stable BCE-with-logits: max(x,0) - x*t + log1p(exp(-|x|))
    bce = jnp.maximum(p, 0.0) - p * t + jnp.log1p(e)
    # sigmoid(p) from the same exponential; approx reciprocal + one Newton step (VPU).
    d = 1.0 + e
    r = pl.reciprocal(d, approx=True)
    r = r * (2.0 - d * r)
    prob = jnp.where(p >= 0.0, 1.0, e) * r
    alpha_factor = t * alpha + (1.0 - t) * (1.0 - alpha)
    x = jnp.abs(t - prob)
    if gamma == 2.0:
        mod = x * x
    elif gamma == 1.5:
        mod = x * jnp.sqrt(x)
    elif gamma == 1.0:
        mod = x
    elif gamma == 0.0:
        mod = jnp.ones_like(x)
    else:
        mod = x ** gamma                           # generic fallback
    return bce * alpha_factor * mod


def _qfocal_reduce_kernel(pred_ref, true_ref, out_ref, acc_ref, *, gamma, alpha,
                          steps, total_tiles, rows_in_last, has_partial, has_dup):
    """grid = (core, step).  Full-tile VPU accumulation; one XLU reduce at the end.

    Only the single partial tile (if any) pays for the row mask; duplicate tiles
    (static over-allocation when total_tiles % cores != 0) are skipped entirely.
    """
    i = pl.program_id(1)

    @pl.when(i == 0)
    def _():
        acc_ref[...] = jnp.zeros_like(acc_ref)

    p = pred_ref[...].astype(jnp.float32)
    t = true_ref[...].astype(jnp.float32)
    loss = _qfocal_elementwise(p, t, gamma, alpha)

    tile = pl.program_id(0) * steps + i

    if not has_partial and not has_dup:
        acc_ref[...] += loss
    elif has_partial and not has_dup:
        is_last = tile == (total_tiles - 1)

        @pl.when(jnp.logical_not(is_last))
        def _():
            acc_ref[...] += loss

        @pl.when(is_last)
        def _():
            r = jax.lax.broadcasted_iota(jnp.int32, loss.shape, 0)
            acc_ref[...] += jnp.where(r < rows_in_last, loss, 0.0)
    elif not has_partial and has_dup:
        @pl.when(tile < total_tiles)
        def _():
            acc_ref[...] += loss
    else:  # partial tile AND duplicate tiles possible
        @pl.when(tile < total_tiles - 1)
        def _():
            acc_ref[...] += loss

        @pl.when(tile == total_tiles - 1)
        def _():
            r = jax.lax.broadcasted_iota(jnp.int32, loss.shape, 0)
            acc_ref[...] += jnp.where(r < rows_in_last, loss, 0.0)

    @pl.when(i == steps - 1)
    def _():
        out_ref[...] = jnp.zeros(out_ref.shape, jnp.float32) + jnp.sum(acc_ref[...])


def _qfocal_none_kernel(pred_ref, true_ref, out_ref, *, gamma, alpha):
    p = pred_ref[...].astype(jnp.float32)
    t = true_ref[...].astype(jnp.float32)
    out_ref[...] = _qfocal_elementwise(p, t, gamma, alpha).astype(out_ref.dtype)


def qfocal_loss(pred, true, *, gamma=1.5, alpha=0.25, reduction="mean"):
    """Pallas implementation of QFocalLoss.forward (loss_fcn = BCEWithLogitsLoss)."""
    assert pred.shape == true.shape
    orig_shape = pred.shape
    n = pred.size
    gamma = float(gamma)
    alpha = float(alpha)
    max_rows, num_cores, vmem_limit = _tpu_defaults()
    sub = max(_sublane_multiple(pred.dtype), _sublane_multiple(true.dtype))
    itemsize = jnp.dtype(pred.dtype).itemsize

    pred_flat = pred.reshape(-1)
    true_flat = true.reshape(-1)
    rem = n % LANE_W

    if reduction in ("mean", "sum"):
        if rem:
            # Loss-neutral pad to the next 512 multiple only (pred=-1e4, true=0 gives
            # bce = sigmoid = mod = 0 exactly), so padded elements never need masking.
            # TODO(synk): manual flat-1D DMA would avoid this single pad copy as well.
            pad = LANE_W - rem
            pred_flat = jnp.pad(pred_flat, (0, pad), constant_values=-1e4)
            true_flat = jnp.pad(true_flat, (0, pad), constant_values=0)
        rows = pred_flat.size // LANE_W
        pred2d = pred_flat.reshape(rows, LANE_W)
        true2d = true_flat.reshape(rows, LANE_W)

        row_tile = _pick_row_tile(rows, max_rows, sub, num_cores)
        total_tiles = pl.cdiv(rows, row_tile)
        num_cores_eff = max(1, min(num_cores, total_tiles))
        steps = pl.cdiv(total_tiles, num_cores_eff)
        rows_in_last = rows - (total_tiles - 1) * row_tile
        has_partial = rows_in_last != row_tile
        has_dup = num_cores_eff * steps != total_tiles

        def in_index(c, i):
            t_ = c * steps + i
            if has_dup:                       # clamp static over-allocation tiles
                t_ = jnp.minimum(t_, total_tiles - 1)
            return (t_, 0)

        kernel = functools.partial(
            _qfocal_reduce_kernel, gamma=gamma, alpha=alpha, steps=steps,
            total_tiles=total_tiles, rows_in_last=rows_in_last,
            has_partial=has_partial, has_dup=has_dup)

        in_spec = pl.BlockSpec((row_tile, LANE_W), in_index)
        out = pl.pallas_call(
            kernel,
            out_shape=jax.ShapeDtypeStruct((num_cores_eff, 1, 128), jnp.float32),
            grid_spec=pltpu.PrefetchScalarGridSpec(
                num_scalar_prefetch=0,
                grid=(num_cores_eff, steps),
                in_specs=[in_spec, in_spec],
                out_specs=pl.BlockSpec((1, 1, 128), lambda c, i: (c, 0, 0)),
                scratch_shapes=[pltpu.VMEM((row_tile, LANE_W), jnp.float32)],
            ),
            compiler_params=pltpu.CompilerParams(
                dimension_semantics=("parallel", "arbitrary"),
                vmem_limit_bytes=vmem_limit),
            cost_estimate=pl.CostEstimate(
                flops=22 * rows * LANE_W,
                transcendentals=3 * rows * LANE_W,
                bytes_accessed=2 * rows * LANE_W * itemsize + num_cores_eff * 128 * 4),
        )(pred2d, true2d)

        total = jnp.sum(out[:, 0, 0])              # combine the per-core partials
        if reduction == "mean":
            return total / n
        return total

    else:  # 'none'
        if rem:
            pad = LANE_W - rem
            pred_flat = jnp.pad(pred_flat, (0, pad))
            true_flat = jnp.pad(true_flat, (0, pad))
        rows = pred_flat.size // LANE_W
        pred2d = pred_flat.reshape(rows, LANE_W)
        true2d = true_flat.reshape(rows, LANE_W)

        row_tile = _pick_row_tile(rows, max_rows, sub, 1)
        n_tiles = pl.cdiv(rows, row_tile)

        kernel = functools.partial(_qfocal_none_kernel, gamma=gamma, alpha=alpha)
        out = pl.pallas_call(
            kernel,
            out_shape=jax.ShapeDtypeStruct((rows, LANE_W), pred.dtype),
            grid_spec=pltpu.PrefetchScalarGridSpec(
                num_scalar_prefetch=0,
                grid=(n_tiles,),
                in_specs=[pl.BlockSpec((row_tile, LANE_W), lambda i: (i, 0)),
                          pl.BlockSpec((row_tile, LANE_W), lambda i: (i, 0))],
                out_specs=pl.BlockSpec((row_tile, LANE_W), lambda i: (i, 0)),
            ),
            compiler_params=pltpu.CompilerParams(
                dimension_semantics=("parallel",),
                vmem_limit_bytes=vmem_limit),
            cost_estimate=pl.CostEstimate(
                flops=22 * rows * LANE_W,
                transcendentals=3 * rows * LANE_W,
                bytes_accessed=3 * rows * LANE_W * itemsize),
        )(pred2d, true2d)

        if rem:
            out = out.reshape(-1)[:n]
        return out.reshape(orig_shape)


def _qfocal_reference(pred, true, gamma=1.5, alpha=0.25, reduction="mean"):
    """Independent pure-JAX reference (standard formulas)."""
    p = pred.astype(jnp.float32)
    t = true.astype(jnp.float32)
    bce = jnp.maximum(p, 0.0) - p * t + jnp.log1p(jnp.exp(-jnp.abs(p)))
    prob = jax.nn.sigmoid(p)
    alpha_factor = t * alpha + (1.0 - t) * (1.0 - alpha)
    mod = jnp.abs(t - prob) ** gamma
    loss = bce * alpha_factor * mod
    if reduction == "mean":
        return loss.mean()
    if reduction == "sum":
        return loss.sum()
    return loss


if __name__ == "__main__":
    key = jax.random.PRNGKey(0)
    k1, k2, k3, k4, k5, k6 = jax.random.split(key, 6)

    # NCHW, as in the PyTorch module usage (detection objectness/class logits).
    pred = jax.random.normal(k1, (2, 4, 16, 16), dtype=jnp.float32) * 2.0
    true = (jax.random.uniform(k2, (2, 4, 16, 16)) > 0.5).astype(jnp.float32)

    out_mean = jax.block_until_ready(qfocal_loss(pred, true, reduction="mean"))
    out_sum = jax.block_until_ready(qfocal_loss(pred, true, reduction="sum"))
    out_none = jax.block_until_ready(qfocal_loss(pred, true, reduction="none"))

    ref_mean = _qfocal_reference(pred, true, reduction="mean")
    ref_sum = _qfocal_reference(pred, true, reduction="sum")
    ref_none = _qfocal_reference(pred, true, reduction="none")

    assert out_none.shape == pred.shape
    assert jnp.allclose(out_mean, ref_mean, rtol=1e-4, atol=1e-6), (out_mean, ref_mean)
    assert jnp.allclose(out_sum, ref_sum, rtol=1e-4, atol=1e-5), (out_sum, ref_sum)
    assert jnp.allclose(out_none, ref_none, rtol=1e-4, atol=1e-6)

    # Non-512-divisible size exercises the loss-neutral tail padding.
    pred2 = jax.random.normal(k3, (3, 5, 7, 11), dtype=jnp.float32)
    true2 = (jax.random.uniform(k4, (3, 5, 7, 11)) > 0.5).astype(jnp.float32)
    out2_mean = jax.block_until_ready(qfocal_loss(pred2, true2, reduction="mean"))
    out2_none = jax.block_until_ready(qfocal_loss(pred2, true2, reduction="none"))
    ref2_mean = _qfocal_reference(pred2, true2, reduction="mean")
    ref2_none = _qfocal_reference(pred2, true2, reduction="none")
    assert jnp.allclose(out2_mean, ref2_mean, rtol=1e-4, atol=1e-6), (out2_mean, ref2_mean)
    assert jnp.allclose(out2_none, ref2_none, rtol=1e-4, atol=1e-6)

    # 512-divisible but row-tile-non-divisible size (9 rows of 512) exercises the
    # no-pad path with an in-kernel masked partial tile + multi-step accumulation.
    pred3 = jax.random.normal(k5, (2, 4, 24, 24), dtype=jnp.float32) * 2.0
    true3 = (jax.random.uniform(k6, (2, 4, 24, 24)) > 0.5).astype(jnp.float32)
    out3_mean = jax.block_until_ready(qfocal_loss(pred3, true3, reduction="mean"))
    ref3_mean = _qfocal_reference(pred3, true3, reduction="mean")
    assert jnp.allclose(out3_mean, ref3_mean, rtol=1e-4, atol=1e-6), (out3_mean, ref3_mean)

    # bf16 inputs (in-kernel cast to f32; dtype-aware sublane rounding).
    pred_b = pred.astype(jnp.bfloat16)
    true_b = true.astype(jnp.bfloat16)
    out_b = jax.block_until_ready(qfocal_loss(pred_b, true_b, reduction="mean"))
    ref_b = _qfocal_reference(pred_b, true_b, reduction="mean")
    assert jnp.allclose(out_b, ref_b, rtol=1e-3, atol=1e-5), (out_b, ref_b)

    print("KERNEL_OK")
</pallas_src>

<mosaic_0001>
module attributes {stable_mosaic.version = 11 : i64} {
  func.func @_qfocal_reduce_kernel(%arg0: i32, %arg1: i32, %arg2: memref<4x512xf32, #tpu.memory_space<vmem>>, %arg3: memref<4x512xf32, #tpu.memory_space<vmem>>, %arg4: memref<1x1x128xf32, #tpu.memory_space<vmem>>, %arg5: memref<4x512xf32, #tpu.memory_space<vmem>>) attributes {dimension_semantics = [#tpu.dimension_semantics<parallel>, #tpu.dimension_semantics<arbitrary>], iteration_bounds = array<i64: 1, 1>, scalar_prefetch = 0 : i64, scratch_operands = 1 : i64, tpu.core_type = #tpu.core_type<tc>, window_params = [{transform_indices = @transform_0, window_bounds = array<i64: 4, 512>}, {transform_indices = @transform_1, window_bounds = array<i64: 4, 512>}, {transform_indices = @transform_2, window_bounds = array<i64: 1, 1, 128>}]} {
    %c0_i32 = arith.constant 0 : i32
    %0 = arith.cmpi eq, %arg1, %c0_i32 : i32
    %1 = arith.extui %0 : i1 to i32
    %c0_i32_0 = arith.constant 0 : i32
    %2 = arith.cmpi ne, %1, %c0_i32_0 : i32
    scf.if %2 {
      %cst_18 = arith.constant 0.000000e+00 : f32
      %46 = vector.broadcast %cst_18 : f32 to vector<4x512xf32>
      %c0_19 = arith.constant 0 : index
      %c0_20 = arith.constant 0 : index
      %47 = vector.load %arg5[%c0_19, %c0_20] : memref<4x512xf32, #tpu.memory_space<vmem>>, vector<4x512xf32>
      tpu.vector_store %arg5[%c0_19, %c0_20], %46 {strides = array<i32>} : memref<4x512xf32, #tpu.memory_space<vmem>>, vector<4x512xf32>,
    } else {
    }
    %c0 = arith.constant 0 : index
    %c0_1 = arith.constant 0 : index
    %3 = vector.load %arg2[%c0, %c0_1] : memref<4x512xf32, #tpu.memory_space<vmem>>, vector<4x512xf32>
    %c0_2 = arith.constant 0 : index
    %c0_3 = arith.constant 0 : index
    %4 = vector.load %arg3[%c0_2, %c0_3] : memref<4x512xf32, #tpu.memory_space<vmem>>, vector<4x512xf32>
    %5 = math.absf %3 : vector<4x512xf32>
    %cst = arith.constant 0.000000e+00 : f32
    %6 = vector.broadcast %cst : f32 to vector<4x512xf32>
    %7 = arith.subf %6, %5 : vector<4x512xf32>
    %8 = math.exp %7 : vector<4x512xf32>
    %cst_4 = arith.constant 0.000000e+00 : f32
    %9 = vector.broadcast %cst_4 : f32 to vector<4x512xf32>
    %10 = arith.maximumf %3, %9 : vector<4x512xf32>
    %11 = arith.mulf %3, %4 : vector<4x512xf32>
    %12 = arith.subf %10, %11 : vector<4x512xf32>
    %13 = math.log1p %8 : vector<4x512xf32>
    %14 = arith.addf %12, %13 : vector<4x512xf32>
    %cst_5 = arith.constant 1.000000e+00 : f32
    %15 = vector.broadcast %cst_5 : f32 to vector<4x512xf32>
    %16 = arith.addf %15, %8 : vector<4x512xf32>
    %17 = tpu.reciprocal %16 {approx = true} : vector<4x512xf32> -> vector<4x512xf32>
    %18 = arith.mulf %16, %17 : vector<4x512xf32>
    %cst_6 = arith.constant 2.000000e+00 : f32
    %19 = vector.broadcast %cst_6 : f32 to vector<4x512xf32>
    %20 = arith.subf %19, %18 : vector<4x512xf32>
    %21 = arith.mulf %17, %20 : vector<4x512xf32>
    %cst_7 = arith.constant 0.000000e+00 : f32
    %22 = vector.broadcast %cst_7 : f32 to vector<4x512xf32>
    %23 = arith.cmpf oge, %3, %22 : vector<4x512xf32>
    %cst_8 = arith.constant 1.000000e+00 : f32
    %24 = vector.broadcast %cst_8 : f32 to vector<4x512xf32>
    %25 = arith.select %23, %24, %8 : vector<4x512xi1>, vector<4x512xf32>
    %26 = arith.mulf %25, %21 : vector<4x512xf32>
    %cst_9 = arith.constant 2.500000e-01 : f32
    %27 = vector.broadcast %cst_9 : f32 to vector<4x512xf32>
    %28 = arith.mulf %4, %27 : vector<4x512xf32>
    %cst_10 = arith.constant 1.000000e+00 : f32
    %29 = vector.broadcast %cst_10 : f32 to vector<4x512xf32>
    %30 = arith.subf %29, %4 : vector<4x512xf32>
    %cst_11 = arith.constant 7.500000e-01 : f32
    %31 = vector.broadcast %cst_11 : f32 to vector<4x512xf32>
    %32 = arith.mulf %30, %31 : vector<4x512xf32>
    %33 = arith.addf %28, %32 : vector<4x512xf32>
    %34 = arith.subf %4, %26 : vector<4x512xf32>
    %35 = math.absf %34 : vector<4x512xf32>
    %36 = math.sqrt %35 : vector<4x512xf32>
    %37 = arith.mulf %35, %36 : vector<4x512xf32>
    %38 = arith.mulf %14, %33 : vector<4x512xf32>
    %39 = arith.mulf %38, %37 : vector<4x512xf32>
    %c0_12 = arith.constant 0 : index
    %c0_13 = arith.constant 0 : index
    %40 = vector.load %arg5[%c0_12, %c0_13] : memref<4x512xf32, #tpu.memory_space<vmem>>, vector<4x512xf32>
    %41 = arith.addf %40, %39 : vector<4x512xf32>
    %c0_14 = arith.constant 0 : index
    %c0_15 = arith.constant 0 : index
    %42 = vector.load %arg5[%c0_14, %c0_15] : memref<4x512xf32, #tpu.memory_space<vmem>>, vector<4x512xf32>
    tpu.vector_store %arg5[%c0_14, %c0_15], %41 {strides = array<i32>} : memref<4x512xf32, #tpu.memory_space<vmem>>, vector<4x512xf32>,
    %c0_i32_16 = arith.constant 0 : i32
    %43 = arith.cmpi eq, %arg1, %c0_i32_16 : i32
    %44 = arith.extui %43 : i1 to i32
    %c0_i32_17 = arith.constant 0 : i32
    %45 = arith.cmpi ne, %44, %c0_i32_17 : i32
    scf.if %45 {
      %cst_18 = arith.constant 0.000000e+00 : f32
      %46 = vector.broadcast %cst_18 : f32 to vector<1x1x128xf32>
      %c0_19 = arith.constant 0 : index
      %c0_20 = arith.constant 0 : index
      %47 = vector.load %arg5[%c0_19, %c0_20] : memref<4x512xf32, #tpu.memory_space<vmem>>, vector<4x512xf32>
      %48 = vector.shape_cast %47 : vector<4x512xf32> to vector<1x4x512xf32>
      %cst_21 = arith.constant dense<0.000000e+00> : vector<1xf32>
      %49 = vector.multi_reduction <add>, %48, %cst_21 [1, 2] : vector<1x4x512xf32> to vector<1xf32>
      %50 = vector.shape_cast %49 : vector<1xf32> to vector<1x1x1xf32>
      %51 = vector.extract %50[0, 0, 0] : f32 from vector<1x1x1xf32>
      %52 = vector.broadcast %51 : f32 to vector<1x1x128xf32>
      %53 = arith.addf %46, %52 : vector<1x1x128xf32>
      %c0_22 = arith.constant 0 : index
      %c0_23 = arith.constant 0 : index
      %c0_24 = arith.constant 0 : index
      %54 = vector.load %arg4[%c0_22, %c0_23, %c0_24] : memref<1x1x128xf32, #tpu.memory_space<vmem>>, vector<1x1x128xf32>
      tpu.vector_store %arg4[%c0_22, %c0_23, %c0_24], %53 {strides = array<i32>} : memref<1x1x128xf32, #tpu.memory_space<vmem>>, vector<1x1x128xf32>,
    } else {
    }
    return
  }
  func.func @transform_0(%arg0: i32, %arg1: i32) -> (i32, i32) {
    %c1_i32 = arith.constant 1 : i32
    %0 = arith.muli %arg0, %c1_i32 : i32
    %1 = arith.addi %0, %arg1 : i32
    %c0_i32 = arith.constant 0 : i32
    %c0_i32_0 = arith.constant 0 : i32
    return %1, %c0_i32 : i32, i32
  }
  func.func @transform_1(%arg0: i32, %arg1: i32) -> (i32, i32) {
    %c1_i32 = arith.constant 1 : i32
    %0 = arith.muli %arg0, %c1_i32 : i32
    %1 = arith.addi %0, %arg1 : i32
    %c0_i32 = arith.constant 0 : i32
    %c0_i32_0 = arith.constant 0 : i32
    return %1, %c0_i32 : i32, i32
  }
  func.func @transform_2(%arg0: i32, %arg1: i32) -> (i32, i32, i32) {
    %c0_i32 = arith.constant 0 : i32
    %c0_i32_0 = arith.constant 0 : i32
    %c0_i32_1 = arith.constant 0 : i32
    return %arg0, %c0_i32, %c0_i32_0 : i32, i32, i32
  }
}

</mosaic_0001>

<llo_original>
// kernel: tpu_custom_call.1
$region0: #{tpu_custom_call.1}
  #allocation0 [shape = 'u32[]', space=smem, size = 0x4, offset = 0x4, fixed_abs, tag = 'smem constant byte address 0x4 - core index']
  #allocation1 [shape = 'u32[144,128]{1,0:T(1,128)}', space=vmem, size = 0x12000, scoped, tag = 'internal scratch']
  #allocation2 [shape = 'f32[4,512]{1,0:T(4,128)}', space=vmem, size = 0x2000, scoped, tag = 'scratch operand']
  %s0 = inlined_call_operand.hbm [shape: f32[4,512], index: 0, kind: input, shape index: {}]
  %s1 = inlined_call_operand.hbm [shape: f32[4,512], index: 1, kind: input, shape index: {}]
  %s2 = inlined_call_operand.hbm [shape: f32[1,1,128], index: 2, kind: output, shape index: {}]
  %s3 = sld [smem:[#allocation0]]
  $region34: #{tpu_custom_call.1} parent=0
    _
  %s5 = ssub.s32 1, %s3
  %s6 = scalar_select 0, %s5, %s3
  $region1: #{tpu_custom_call.1} parent=0
    #allocation3 [shape = 'u8[8192]{0}', space=vmem, size = 0x2000, scoped, tag = 'input window, operand 0, single buffered']
    #allocation4 [shape = 's32[1]{0}', space=sflag, size = 0x4, scoped, tag = 'scoped memory for tpu_custom_call.1']
    #allocation5 [shape = 's32[1]{0}', space=sflag, size = 0x4, scoped, tag = 'scoped memory for tpu_custom_call.1']
    #allocation6 [shape = 'u8[8192]{0}', space=vmem, size = 0x2000, scoped, tag = 'input window, operand 1, single buffered']
    #allocation7 [shape = 's32[1]{0}', space=sflag, size = 0x4, scoped, tag = 'scoped memory for tpu_custom_call.1']
    #allocation8 [shape = 'u8[512]{0}', space=vmem, size = 0x400, scoped, tag = 'output window, operand 0, single buffered']
    %7 = vsyncpa [#allocation4], 0
    %8 = vsyncpa [#allocation7], 0
    %9 = vsyncpa [#allocation5], 0
    // Predicated region
    $region2: #{tpu_custom_call.1} parent=1 // pred_check
      _
    $region3: #{tpu_custom_call.1} parent=1 // pred_check_branch
      %11 = sbr.rel (0) target = $region5
    $region4: #{tpu_custom_call.1} parent=1 // pred_region
      %s12 = sadd.s32 0, 0
      %s14 = ssub.s32 256, 256
      %15 = vsyncadd [#allocation4], %s14
      %s16 = smul.addr %s12, 4
      %s17 = smul.addr %s16, 64
      %s18 = scalar_lea.hbm %s0, %s17
      %s20 = sshll.u32 [#allocation3], 4
      %s21 = int_to_ptr.vmem [resolvable:$true] %s20
      %23 = dma.hbm_to_vmem [thread:$0]  %s18, 256, %s21, [#allocation4]
    $region5: #{tpu_custom_call.1} parent=1 // pred_fallthru
      _
    // Predicated region
    $region6: #{tpu_custom_call.1} parent=1 // pred_check
      _
    $region7: #{tpu_custom_call.1} parent=1 // pred_check_branch
      %25 = sbr.rel (0) target = $region9
    $region8: #{tpu_custom_call.1} parent=1 // pred_region
      %s26 = sadd.s32 0, 0
      %s28 = ssub.s32 256, 256
      %29 = vsyncadd [#allocation7], %s28
      %s30 = smul.addr %s26, 4
      %s31 = smul.addr %s30, 64
      %s32 = scalar_lea.hbm %s1, %s31
      %s34 = sshll.u32 [#allocation6], 4
      %s35 = int_to_ptr.vmem [resolvable:$true] %s34
      %37 = dma.hbm_to_vmem [thread:$0]  %s32, 256, %s35, [#allocation7]
    $region9: #{tpu_custom_call.1} parent=1 // pred_fallthru
      _
    // Predicated region
    $region10: #{tpu_custom_call.1} parent=1 // pred_check
      _
    $region11: #{tpu_custom_call.1} parent=1 // pred_check_branch
      %39 = sbr.rel (0) target = $region13
    $region12: #{tpu_custom_call.1} parent=1 // pred_region
      %40 = dma.done [#allocation4], 256
    $region13: #{tpu_custom_call.1} parent=1 // pred_fallthru
      _
    // Predicated region
    $region14: #{tpu_custom_call.1} parent=1 // pred_check
      _
    $region15: #{tpu_custom_call.1} parent=1 // pred_check_branch
      %42 = sbr.rel (0) target = $region17
    $region16: #{tpu_custom_call.1} parent=1 // pred_region
      %43 = dma.done [#allocation7], 256
    $region17: #{tpu_custom_call.1} parent=1 // pred_fallthru
      _
    %s44 = sadd.s32 0, 0
    %s45 = sadd.s32 0, 0
    %p46 = scmp.eq.s32.totalorder 0, 0
    // Predicated region
    $region18: #{tpu_custom_call.1} parent=1 // pred_check
      %p47 = pneg %p46
    $region19: #{tpu_custom_call.1} parent=1 // pred_check_branch
      %49 = sbr.rel (%p47) target = $region21
    $region20: #{tpu_custom_call.1} parent=1 // pred_region
      %50 = vst [vmem:[#allocation2] sm:$0xff] 0.0
      %51 = vst [vmem:[#allocation2 + $0x8] sm:$0xff] 0.0
    $region21: #{tpu_custom_call.1} parent=1 // pred_fallthru
      _
    %v52 = vld [vmem:[#allocation3] sm:$0xff]
    %v53 = vld [vmem:[#allocation3 + $0x8] sm:$0xff]
    %v54 = vld [vmem:[#allocation6] sm:$0xff]
    %v55 = vld [vmem:[#allocation6 + $0x8] sm:$0xff]
    %v56 = vand.u32 2147483647, %v52
    %v57 = vand.u32 2147483647, %v53
    %v58 = vsub.f32 0.0, %v56
    %v59 = vsub.f32 0.0, %v57
    %v60 = vmul.f32 %v58, 1.442695
    %v61 = vpow.pop %v60
    %v62 = vmul.f32 %v59, 1.442695
    %v63 = vpow.pop %v62
    %v64 = vmax.f32 %v52, 0.0
    %v65 = vmax.f32 %v53, 0.0
    %v66 = vmul.f32 %v52, %v54
    %v67 = vmul.f32 %v53, %v55
    %v68 = vsub.f32 %v64, %v66
    %v69 = vsub.f32 %v65, %v67
    %v70 = vadd.f32 %v61, 1.0
    %v71 = vlog2.pop %v70
    %v72 = vmul.f32 %v71, 0.6931472
    %v73 = vmul.f32 -0.5, %v61
    %v74 = vadd.f32 %v73, 1.0
    %v75 = vmul.f32 %v74, %v61
    %v76 = vand.u32 2147483647, %v61
    %vm77 = vcmp.lt.f32.partialorder %v76, 0.0004427343
    %v78 = vsel %vm77, %v75, %v72
    %v79 = vadd.f32 %v63, 1.0
    %v80 = vlog2.pop %v79
    %v81 = vmul.f32 %v80, 0.6931472
    %v82 = vmul.f32 -0.5, %v63
    %v83 = vadd.f32 %v82, 1.0
    %v84 = vmul.f32 %v83, %v63
    %v85 = vand.u32 2147483647, %v63
    %vm86 = vcmp.lt.f32.partialorder %v85, 0.0004427343
    %v87 = vsel %vm86, %v84, %v81
    %v88 = vadd.f32 %v68, %v78
    %v89 = vadd.f32 %v69, %v87
    %v90 = vadd.f32 %v61, 1.0
    %v91 = vadd.f32 %v63, 1.0
    %v92 = vrcp.pop %v90
    %v93 = vrcp.pop %v91
    %v94 = vmul.f32 %v90, %v92
    %v95 = vmul.f32 %v91, %v93
    %v96 = vsub.f32 2.0, %v94
    %v97 = vsub.f32 2.0, %v95
    %v98 = vmul.f32 %v92, %v96
    %v99 = vmul.f32 %v93, %v97
    %vm100 = vcmp.ge.f32.partialorder %v52, 0.0
    %vm101 = vcmp.ge.f32.partialorder %v53, 0.0
    %v102 = vsel %vm100, 1.0, %v61
    %v103 = vsel %vm101, 1.0, %v63
    %v104 = vmul.f32 %v102, %v98
    %v105 = vmul.f32 %v103, %v99
    %v106 = vmul.f32 %v54, 0.25
    %v107 = vmul.f32 %v55, 0.25
    %v108 = vsub.f32 1.0, %v54
    %v109 = vsub.f32 1.0, %v55
    %v110 = vmul.f32 %v108, 0.75
    %v111 = vmul.f32 %v109, 0.75
    %v112 = vadd.f32 %v106, %v110
    %v113 = vadd.f32 %v107, %v111
    %v114 = vsub.f32 %v54, %v104
    %v115 = vsub.f32 %v55, %v105
    %v116 = vand.u32 2147483647, %v114
    %v117 = vand.u32 2147483647, %v115
    %v118 = vrsqrt.pop %v116
    %v119 = vmul.f32 %v116, %v118
    %vm120 = vcmp.eq.f32.partialorder %v116, inf
    %v121 = vsel %vm120, %v116, %v119
    %vm122 = vcmp.eq.f32.partialorder %v116, 0.0
    %v123 = vand.u32 %v116, 2147483648
    %v124 = vsel %vm122, %v123, %v121
    %v125 = vrsqrt.pop %v117
    %v126 = vmul.f32 %v117, %v125
    %vm127 = vcmp.eq.f32.partialorder %v117, inf
    %v128 = vsel %vm127, %v117, %v126
    %vm129 = vcmp.eq.f32.partialorder %v117, 0.0
    %v130 = vand.u32 %v117, 2147483648
    %v131 = vsel %vm129, %v130, %v128
    %v132 = vmul.f32 %v116, %v124
    %v133 = vmul.f32 %v117, %v131
    %v134 = vmul.f32 %v88, %v112
    %v135 = vmul.f32 %v89, %v113
    %v136 = vmul.f32 %v134, %v132
    %v137 = vmul.f32 %v135, %v133
    %v138 = vld [vmem:[#allocation2] sm:$0xff]
    %v139 = vld [vmem:[#allocation2 + $0x8] sm:$0xff]
    %v140 = vadd.f32 %v138, %v136
    %v141 = vadd.f32 %v139, %v137
    %142 = vst [vmem:[#allocation2] sm:$0xff] %v140
    %143 = vst [vmem:[#allocation2 + $0x8] sm:$0xff] %v141
    // Predicated region
    $region22: #{tpu_custom_call.1} parent=1 // pred_check
      %p144 = pneg %p46
    $region23: #{tpu_custom_call.1} parent=1 // pred_check_branch
      %146 = sbr.rel (%p144) target = $region25
    $region24: #{tpu_custom_call.1} parent=1 // pred_region
      %v147 = vld [vmem:[#allocation2] sm:$0xff]
      %v148 = vld [vmem:[#allocation2 + $0x8] sm:$0xff]
      %v151 = vcombine.high %v147, %v147
      %v152 = vcombine.high %v148, %v148
      %vm155 = vcmask 1043456
      %v156 = vsel %vm155, %v147, 0.0
      %v157 = vsel %vm155, %v151, 0.0
      %v158 = vadd.f32 %v156, %v157
      %v159 = vsel %vm155, %v148, 0.0
      %v160 = vadd.f32 %v158, %v159
      %v161 = vsel %vm155, %v152, 0.0
      %v162 = vadd.f32 %v160, %v161
      %163 = vadd.xlane.f32.xlu0 %v162
      %v164 = vpop.xlane.xlu0 %163
      %v165 = vrot.slane %v164, 4
      %v166 = vadd.f32 %v164, %v165
      %v167 = vrot.slane %v166, 2
      %v168 = vadd.f32 %v166, %v167
      %v169 = vrot.slane %v168, 1
      %v170 = vadd.f32 %v168, %v169
      %s171 = vtos %v170
      %v172 = vstv %s171
      %v173 = vadd.f32 %v172, 0.0
      %174 = vst [vmem:[#allocation8] sm:$0x1] %v173
    $region25: #{tpu_custom_call.1} parent=1 // pred_fallthru
      _
    // Predicated region
    $region26: #{tpu_custom_call.1} parent=1 // pred_check
      _
    $region27: #{tpu_custom_call.1} parent=1 // pred_check_branch
      %176 = sbr.rel (0) target = $region29
    $region28: #{tpu_custom_call.1} parent=1 // pred_region
      %s178 = ssub.s32 16, 16
      %179 = vsyncadd [#allocation5], %s178
      %s181 = sshll.u32 [#allocation8], 4
      %s182 = int_to_ptr.vmem [resolvable:$true] %s181
      %184 = dma.vmem_to_hbm [thread:$0]  %s182, 16, %s2, [#allocation5]
    $region29: #{tpu_custom_call.1} parent=1 // pred_fallthru
      _
    // Predicated region
    $region30: #{tpu_custom_call.1} parent=1 // pred_check
      _
    $region31: #{tpu_custom_call.1} parent=1 // pred_check_branch
      %186 = sbr.rel (0) target = $region33
    $region32: #{tpu_custom_call.1} parent=1 // pred_region
      %187 = dma.done [#allocation5], 16
    $region33: #{tpu_custom_call.1} parent=1 // pred_fallthru
      _
    %188 = vsyncpa [#allocation4], 1
    %189 = vsyncpa [#allocation7], 1
    %190 = vsyncpa [#allocation5], 1

</llo_original>
